<compile_context>
chip_gen: v7x
topology: tpu7x:2x2x1
jax: 0.10.0
libtpu: 0.0.40
codegen_flags: <defaults>
</compile_context>

<pallas_src>
import jax
import jax.numpy as jnp
from jax.experimental import pallas as pl
from jax.experimental.pallas import tpu as pltpu


# ----------------------------------------------------------------------------
# Backward kernel: elementwise scale by a runtime scalar
# ----------------------------------------------------------------------------
_LANE_CANDIDATES = (512, 256, 128)      # lane-dense last dims (multiples of 128)
_MAX_BLOCK_BYTES = 4 * 1024 * 1024      # ~4 MiB/block -> 4 live buffers ~16 MiB VMEM
_MIN_GRID_STEPS = 4                     # pipelining overlap + dual-TC sharding (v7x)


def _round_up(a: int, b: int) -> int:
    return -(-a // b) * b


def _scale_kernel(scale_ref, g_ref, o_ref):
    # Runtime scalar from SMEM, cast to the gradient's native dtype so bf16
    # gradients stay bf16 on the VPU (one vmul; trivially memory-bound).
    o_ref[...] = g_ref[...] * scale_ref[0, 0].astype(o_ref.dtype)


def _scale_pallas(g, scale):
    """Return g * scale (scale is a runtime f32 scalar; no recompile per value)."""
    orig_shape = g.shape
    n = g.size
    if n == 0:
        return g

    scale = jnp.asarray(scale, dtype=jnp.float32)

    # Factor a lane-dense last dim out of the flat element count (zero-copy
    # reshape of a contiguous buffer). Only truly irregular sizes fall back.
    lane = None
    for cand in _LANE_CANDIDATES:
        if n % cand == 0:
            lane = cand
            break
    if lane is None:
        # Irregular size: a padded Pallas pass would add 1-2 extra full HBM
        # copies; a plain multiply fuses with the cotangent's producer instead.
        return (g * scale.astype(g.dtype)).astype(g.dtype)

    rows = n // lane
    g2d = g.reshape(rows, lane)                      # zero-copy

    itemsize = g.dtype.itemsize
    max_rows = max(8, (_MAX_BLOCK_BYTES // (lane * itemsize)) // 8 * 8)

    # Target >= _MIN_GRID_STEPS grid steps so block i+1's load overlaps block
    # i's store and the "parallel" axis can shard across both v7x TensorCores,
    # subject to the ~4 MiB per-block VMEM cap. Blocks are multiples of 8 rows.
    tr = _round_up(pl.cdiv(rows, _MIN_GRID_STEPS), 8)
    tr = min(tr, max_rows)
    if tr >= rows:
        tr = rows                                    # tiny tensor: one full-extent block

    grid = (pl.cdiv(rows, tr),)

    scale_2d = scale.reshape(1, 1)

    out2d = pl.pallas_call(
        _scale_kernel,
        out_shape=jax.ShapeDtypeStruct(g2d.shape, g.dtype),
        grid=grid,
        in_specs=[
            pl.BlockSpec(memory_space=pltpu.MemorySpace.SMEM),       # scale (1,1)
            pl.BlockSpec((tr, lane), lambda i: (i, 0)),              # gradient tile
        ],
        out_specs=pl.BlockSpec((tr, lane), lambda i: (i, 0)),
        # Scale the cotangent in place (no second full-size HBM buffer).
        input_output_aliases={1: 0},
        compiler_params=pltpu.CompilerParams(
            dimension_semantics=("parallel",),
        ),
        cost_estimate=pl.CostEstimate(
            flops=n,
            transcendentals=0,
            bytes_accessed=2 * n * itemsize,
        ),
    )(scale_2d, g2d)

    return out2d.reshape(orig_shape)


# ----------------------------------------------------------------------------
# custom_vjp: identity forward, -grad_weight * g backward
# ----------------------------------------------------------------------------
@jax.custom_vjp
def _grl(x, grad_weight):
    # Forward is identity: no kernel, no HBM traffic.
    return x


def _grl_fwd(x, grad_weight):
    return x, grad_weight


def _grl_bwd(grad_weight, g):
    dx = _scale_pallas(g, -grad_weight)
    # No gradient flows into grad_weight (PyTorch returns None for it).
    return dx, jnp.zeros_like(grad_weight)


_grl.defvjp(_grl_fwd, _grl_bwd)


# ----------------------------------------------------------------------------
# GradientReversalModule equivalent
# ----------------------------------------------------------------------------
class GradientReversalModule:
    """JAX/Pallas equivalent of the PyTorch GradientReversalModule.

    forward:  identity
    backward: grad_in = -grad_weight * grad_out (Pallas elementwise kernel)

    grad_weight is a runtime traced scalar, so annealing it during training
    does not retrace or recompile the backward kernel. It may also be passed
    explicitly per call (recommended inside jit'd training steps).
    """

    def __init__(self, grad_weight: float = 1.0):
        self.grad_weight = float(grad_weight)

    def __call__(self, x, grad_weight=None):
        gw = self.grad_weight if grad_weight is None else grad_weight
        return _grl(x, jnp.asarray(gw, dtype=jnp.float32))


if __name__ == "__main__":
    key = jax.random.PRNGKey(0)
    k0, k1, k2, k3 = jax.random.split(key, 4)

    grl = GradientReversalModule(grad_weight=1.0)

    # --- Small NCHW-style tensor (2048 elems -> (4, 512) slab, single block) ---
    x = jax.random.normal(k0, (2, 4, 16, 16), dtype=jnp.float32)
    y = jax.block_until_ready(grl(x))
    assert y.shape == x.shape and y.dtype == x.dtype
    assert bool(jnp.allclose(y, x)), "forward must be identity"

    g = jax.block_until_ready(jax.grad(lambda v: jnp.sum(grl(v)))(x))
    assert bool(jnp.allclose(g, -1.0 * jnp.ones_like(x))), "backward must be -grad_weight * g"

    # grad_weight is adjustable after construction (runtime scalar, no rebake).
    grl.grad_weight = 0.5
    g2 = jax.block_until_ready(jax.grad(lambda v: jnp.sum(grl(v)))(x))
    assert bool(jnp.allclose(g2, -0.5 * jnp.ones_like(x))), "adjusted grad_weight must apply"

    # --- Larger tensor exercising the multi-step tiled grid (rows=512, grid=4) ---
    x_big = jax.random.normal(k1, (8, 8, 64, 64), dtype=jnp.float32)
    g_big = jax.block_until_ready(jax.grad(lambda v: jnp.sum(jnp.sin(grl(v))))(x_big))
    expected_big = -0.5 * jnp.cos(x_big)
    assert bool(jnp.allclose(g_big, expected_big, atol=1e-6)), "tiled multi-block path must match"

    # --- bf16 gradients stay bf16 through the kernel ---
    x_bf16 = jax.random.normal(k2, (2, 4, 16, 16), dtype=jnp.bfloat16)
    g_bf16 = jax.block_until_ready(jax.grad(lambda v: jnp.sum(grl(v).astype(jnp.float32)))(x_bf16))
    assert g_bf16.dtype == jnp.bfloat16
    assert bool(jnp.allclose(g_bf16.astype(jnp.float32), -0.5 * jnp.ones(x_bf16.shape))), \
        "bf16 path must match"

    # --- Irregular size (105 elems): fused jnp fallback, no pad/slice HBM passes ---
    x_odd = jax.random.normal(k3, (3, 5, 7), dtype=jnp.float32)
    g_odd = jax.block_until_ready(jax.grad(lambda v: jnp.sum(grl(v)))(x_odd))
    assert bool(jnp.allclose(g_odd, -0.5 * jnp.ones_like(x_odd))), "irregular fallback must match"

    print("KERNEL_OK")
</pallas_src>

<mosaic_0001>
module attributes {stable_mosaic.version = 11 : i64} {
  func.func @_scale_kernel(%arg0: i32, %arg1: memref<1x1xf32, #tpu.memory_space<smem>>, %arg2: memref<4x512xf32, #tpu.memory_space<vmem>>, %arg3: memref<4x512xf32, #tpu.memory_space<vmem>>) attributes {dimension_semantics = [#tpu.dimension_semantics<parallel>], iteration_bounds = array<i64: 1>, scalar_prefetch = 0 : i64, scratch_operands = 0 : i64, tpu.core_type = #tpu.core_type<tc>, window_params = [{transform_indices = @transform_0, window_bounds = array<i64: 1, 1>}, {transform_indices = @transform_1, window_bounds = array<i64: 4, 512>}, {transform_indices = @transform_2, window_bounds = array<i64: 4, 512>}]} {
    %c0 = arith.constant 0 : index
    %c0_0 = arith.constant 0 : index
    %0 = vector.load %arg2[%c0, %c0_0] : memref<4x512xf32, #tpu.memory_space<vmem>>, vector<4x512xf32>
    %c0_1 = arith.constant 0 : index
    %c0_2 = arith.constant 0 : index
    %1 = memref.load %arg1[%c0_1, %c0_2] : memref<1x1xf32, #tpu.memory_space<smem>>
    %2 = vector.broadcast %1 : f32 to vector<4x512xf32>
    %3 = arith.mulf %0, %2 : vector<4x512xf32>
    %c0_3 = arith.constant 0 : index
    %c0_4 = arith.constant 0 : index
    %4 = vector.load %arg3[%c0_3, %c0_4] : memref<4x512xf32, #tpu.memory_space<vmem>>, vector<4x512xf32>
    tpu.vector_store %arg3[%c0_3, %c0_4], %3 {strides = array<i32>} : memref<4x512xf32, #tpu.memory_space<vmem>>, vector<4x512xf32>,
    return
  }
  func.func @transform_0(%arg0: i32) -> (i32, i32) {
    %c0_i32 = arith.constant 0 : i32
    %c0_i32_0 = arith.constant 0 : i32
    %c0_i32_1 = arith.constant 0 : i32
    return %c0_i32, %c0_i32_0 : i32, i32
  }
  func.func @transform_1(%arg0: i32) -> (i32, i32) {
    %c0_i32 = arith.constant 0 : i32
    %c0_i32_0 = arith.constant 0 : i32
    return %arg0, %c0_i32 : i32, i32
  }
  func.func @transform_2(%arg0: i32) -> (i32, i32) {
    %c0_i32 = arith.constant 0 : i32
    %c0_i32_0 = arith.constant 0 : i32
    return %arg0, %c0_i32 : i32, i32
  }
}

</mosaic_0001>

<llo_original>
// kernel: tpu_custom_call.1
$region0: #{tpu_custom_call.1}
  #allocation0 [shape = 'u32[]', space=smem, size = 0x4, offset = 0x4, fixed_abs, tag = 'smem constant byte address 0x4 - core index']
  #allocation1 [shape = 'u32[144,128]{1,0:T(1,128)}', space=vmem, size = 0x12000, scoped, tag = 'internal scratch']
  #allocation2 [shape = 'f32[1,1]{1,0:T(1,128)S(6)}', space=smem, size = 0x200, scoped, tag = 'scoped memory for tpu_custom_call.1']
  %s0 = inlined_call_operand.<no memory space> [shape: f32[1,1], index: 0, kind: input, shape index: {}]
  %s1 = inlined_call_operand.hbm [shape: f32[4,512], index: 1, kind: input, shape index: {}, may-alias: {1,2}]
  %s2 = inlined_call_operand.hbm [shape: f32[4,512], index: 2, kind: output, shape index: {}, may-alias: {1,2}]
  %s3 = sld [smem:[#allocation0]]
  $region22: #{tpu_custom_call.1} parent=0
    _
  %s5 = ssub.s32 1, %s3
  %s6 = scalar_select 0, %s5, %s3
  %7 = sst [smem:[#allocation2]] %s0
  $region1: #{tpu_custom_call.1} parent=0
    #allocation3 [shape = 'u8[8192]{0}', space=vmem, size = 0x2000, scoped, tag = 'input window, operand 1, single buffered']
    #allocation4 [shape = 's32[1]{0}', space=sflag, size = 0x4, scoped, tag = 'scoped memory for tpu_custom_call.1']
    #allocation5 [shape = 's32[1]{0}', space=sflag, size = 0x4, scoped, tag = 'scoped memory for tpu_custom_call.1']
    #allocation6 [shape = 'u8[8192]{0}', space=vmem, size = 0x2000, scoped, tag = 'output window, operand 0, single buffered']
    %8 = vsyncpa [#allocation4], 0
    %9 = vsyncpa [#allocation5], 0
    // Predicated region
    $region2: #{tpu_custom_call.1} parent=1 // pred_check
      _
    $region3: #{tpu_custom_call.1} parent=1 // pred_check_branch
      %11 = sbr.rel (0) target = $region5
    $region4: #{tpu_custom_call.1} parent=1 // pred_region
      _
    $region5: #{tpu_custom_call.1} parent=1 // pred_fallthru
      _
    // Predicated region
    $region6: #{tpu_custom_call.1} parent=1 // pred_check
      _
    $region7: #{tpu_custom_call.1} parent=1 // pred_check_branch
      %13 = sbr.rel (0) target = $region9
    $region8: #{tpu_custom_call.1} parent=1 // pred_region
      %s15 = ssub.s32 256, 256
      %16 = vsyncadd [#allocation4], %s15
      %s18 = sshll.u32 [#allocation3], 4
      %s19 = int_to_ptr.vmem [resolvable:$true] %s18
      %21 = dma.hbm_to_vmem [thread:$0]  %s1, 256, %s19, [#allocation4]
    $region9: #{tpu_custom_call.1} parent=1 // pred_fallthru
      _
    // Predicated region
    $region10: #{tpu_custom_call.1} parent=1 // pred_check
      _
    $region11: #{tpu_custom_call.1} parent=1 // pred_check_branch
      %23 = sbr.rel (0) target = $region13
    $region12: #{tpu_custom_call.1} parent=1 // pred_region
      %24 = dma.done [#allocation4], 256
    $region13: #{tpu_custom_call.1} parent=1 // pred_fallthru
      _
    %v25 = vld [vmem:[#allocation3] sm:$0xff]
    %v26 = vld [vmem:[#allocation3 + $0x8] sm:$0xff]
    %s27 = sld [smem:[#allocation2]]
    %v28 = vstv %s27
    %v29 = vmul.f32 %v25, %v28
    %v30 = vmul.f32 %v26, %v28
    %31 = vst [vmem:[#allocation6] sm:$0xff] %v29
    %32 = vst [vmem:[#allocation6 + $0x8] sm:$0xff] %v30
    // Predicated region
    $region14: #{tpu_custom_call.1} parent=1 // pred_check
      _
    $region15: #{tpu_custom_call.1} parent=1 // pred_check_branch
      %34 = sbr.rel (0) target = $region17
    $region16: #{tpu_custom_call.1} parent=1 // pred_region
      %s36 = ssub.s32 256, 256
      %37 = vsyncadd [#allocation5], %s36
      %s39 = sshll.u32 [#allocation6], 4
      %s40 = int_to_ptr.vmem [resolvable:$true] %s39
      %42 = dma.vmem_to_hbm [thread:$0]  %s40, 256, %s2, [#allocation5]
    $region17: #{tpu_custom_call.1} parent=1 // pred_fallthru
      _
    // Predicated region
    $region18: #{tpu_custom_call.1} parent=1 // pred_check
      _
    $region19: #{tpu_custom_call.1} parent=1 // pred_check_branch
      %44 = sbr.rel (0) target = $region21
    $region20: #{tpu_custom_call.1} parent=1 // pred_region
      %45 = dma.done [#allocation5], 256
    $region21: #{tpu_custom_call.1} parent=1 // pred_fallthru
      _
    %46 = vsyncpa [#allocation4], 1
    %47 = vsyncpa [#allocation5], 1

</llo_original>
